<compile_context>
chip_gen: v7x
topology: tpu7x:2x2x1
jax: 0.10.0
libtpu: 0.0.40
codegen_flags: <defaults>
</compile_context>

<pallas_src>
import functools

import jax
import jax.numpy as jnp
from jax.experimental import pallas as pl
from jax.experimental.pallas import tpu as pltpu


def _round_up(a, b):
    return (a + b - 1) // b * b


def _channel_attention_kernel(x_ref, w1_ref, w2_ref, o_ref,
                              sum_acc, max_acc, *,
                              s_true, s_tile, s_rem, needs_mask, use_mxu_sum):
    # x_ref  : (C, S_TILE)  spatial tile of one image (last tile may be ragged)
    # w1_ref : (Ch, C)      fc1 1x1-conv weight
    # w2_ref : (C, Ch)      fc2 1x1-conv weight
    # o_ref  : (C, 1)       sigmoid(fc2(relu(fc1(avg))) + fc2(relu(fc1(max))))
    # sum_acc, max_acc : (C, 1) f32 running spatial sum / max (VMEM scratch)
    s = pl.program_id(1)
    last = pl.num_programs(1) - 1

    @pl.when(s == 0)
    def _init():
        sum_acc[...] = jnp.zeros(sum_acc.shape, sum_acc.dtype)
        max_acc[...] = jnp.full(max_acc.shape, -jnp.inf, max_acc.dtype)

    x = x_ref[...]                      # native dtype, no full-tile f32 copy

    if use_mxu_sum:
        # N=1 "ones" column; tile sizing in the wrapper accounts for its
        # 128-lane padding so it never dominates VMEM.
        ones = jnp.ones((s_tile, 1), dtype=x.dtype)

    def update(x_sum, x_max):
        if use_mxu_sum:
            # Row sums on the (otherwise idle) MXU, f32 accumulation.
            sum_acc[...] += jnp.dot(x_sum, ones,
                                    preferred_element_type=jnp.float32)
        else:
            sum_acc[...] += jnp.sum(x_sum, axis=-1, keepdims=True,
                                    dtype=jnp.float32)
        # Running max: per-tile cross-lane reduce (XLU) + tiny f32 maximum.
        max_acc[...] = jnp.maximum(
            max_acc[...],
            jnp.max(x_max, axis=-1, keepdims=True).astype(jnp.float32))

    if needs_mask:
        # Only the FINAL spatial tile is ragged (reads past S are undefined),
        # so only that tile pays for the iota/compare/select; every other
        # tile runs the cheap unmasked update.
        @pl.when(s < last)
        def _steady():
            update(x, x)

        @pl.when(s == last)
        def _ragged():
            lane = jax.lax.broadcasted_iota(jnp.int32, (1, s_tile), 1)
            valid = lane < s_rem                      # broadcasts over C rows
            update(jnp.where(valid, x, 0.0),          # neutral for the sum
                   jnp.where(valid, x, -jnp.inf))     # neutral for the max
    else:
        update(x, x)

    @pl.when(s == last)
    def _epilogue():
        avg = sum_acc[...] * (1.0 / float(s_true))            # (C, 1) f32
        # Stack avg & max columns -> one matmul per MLP layer.
        cols = jnp.concatenate([avg, max_acc[...]], axis=1)   # (C, 2)
        w1 = w1_ref[...].astype(jnp.float32)                  # (Ch, C)
        w2 = w2_ref[...].astype(jnp.float32)                  # (C, Ch)
        h = jnp.maximum(
            jnp.dot(w1, cols, preferred_element_type=jnp.float32), 0.0)
        y = jnp.dot(w2, h, preferred_element_type=jnp.float32)  # (C, 2)
        out = jax.nn.sigmoid(y[:, 0:1] + y[:, 1:2])              # (C, 1)
        o_ref[...] = out.astype(o_ref.dtype)


def channel_attention(x, w1, w2, *, target_block_bytes=None):
    """CBAM channel attention.  x: (B,C,H,W) NCHW, w1: (Ch,C,1,1), w2: (C,Ch,1,1)."""
    B, C, H, W = x.shape
    Ch = w1.shape[0]
    S = H * W
    itemsize = x.dtype.itemsize
    LANE = 128

    # ---- generation-aware VMEM budget / tile sizing ------------------------
    try:
        vmem_cap = int(getattr(pltpu.get_tpu_info(), "vmem_capacity_bytes",
                               64 * 2**20))
    except Exception:
        vmem_cap = 64 * 2**20
    vmem_budget = min(vmem_cap * 3 // 4, 96 * 2**20)     # 48 MiB v7x, 96 MiB v5e/v6e
    if target_block_bytes is None:
        target_block_bytes = min(16 * 2**20,
                                 max(1 << 20, (vmem_budget - 4 * 2**20) // 3))

    # MXU sum offload only when C is wide enough to amortize the padded
    # (S_TILE, 1) ones column; small C keeps the VPU path (plenty of slack).
    use_mxu_sum = C >= 128

    # Spatial tile: multiple of 128 lanes (or the full extent), sized so the
    # x block plus the padded ones column stay within the per-step target —
    # this also clamps the footprint consistently when C is very large.
    lane_cost = (C + (LANE if use_mxu_sum else 0)) * itemsize
    max_lanes = max(LANE, (target_block_bytes // lane_cost) // LANE * LANE)
    if S <= max_lanes:
        S_TILE = S                     # whole image per step (full-dim block)
        needs_mask = False
    else:
        S_TILE = int(max_lanes)
        needs_mask = (S % S_TILE) != 0
    grid_s = pl.cdiv(S, S_TILE)
    s_rem = S - (grid_s - 1) * S_TILE  # valid lanes in the final (ragged) tile

    # No host-side padding or copies: reshape is free, weights are just viewed
    # as channel matmul operands, ragged tail handled in-kernel.
    x_flat = x.reshape(B, C, S)
    w1m = w1.reshape(Ch, C)
    w2m = w2.reshape(C, Ch)

    kernel = functools.partial(
        _channel_attention_kernel, s_true=S, s_tile=S_TILE, s_rem=s_rem,
        needs_mask=needs_mask, use_mxu_sum=use_mxu_sum)

    block_bytes = C * S_TILE * itemsize
    ones_bytes = S_TILE * LANE * itemsize if use_mxu_sum else 0
    fixed_bytes = (16 * Ch * C                       # resident fc1/fc2 weights
                   + 2 * _round_up(C, 8) * LANE * 4  # (C,1) f32 accumulators
                   + (2 << 20))                      # headroom
    vmem_needed = 2 * block_bytes + ones_bytes + fixed_bytes
    vmem_limit = int(min(vmem_budget, max(16 * 2**20, vmem_needed)))

    # Grid: one image per "parallel" step (TB=1 -> no batch padding ever),
    # spatial reduction on the trailing "arbitrary" axis.
    # TODO(synk): for B == 1 on v7x, split the spatial reduction across the
    # two TensorCores (partial sums/maxes + tiny combine) so both cores work.
    out = pl.pallas_call(
        kernel,
        out_shape=jax.ShapeDtypeStruct((B, C, 1), x.dtype),
        grid_spec=pltpu.PrefetchScalarGridSpec(
            num_scalar_prefetch=0,
            grid=(B, grid_s),
            in_specs=[
                pl.BlockSpec((None, C, S_TILE), lambda b, s: (b, 0, s)),
                pl.BlockSpec((Ch, C), lambda b, s: (0, 0)),
                pl.BlockSpec((C, Ch), lambda b, s: (0, 0)),
            ],
            out_specs=pl.BlockSpec((None, C, 1), lambda b, s: (b, 0, 0)),
            scratch_shapes=[pltpu.VMEM((C, 1), jnp.float32),
                            pltpu.VMEM((C, 1), jnp.float32)],
        ),
        compiler_params=pltpu.CompilerParams(
            dimension_semantics=("parallel", "arbitrary"),
            vmem_limit_bytes=vmem_limit),
    )(x_flat, w1m, w2m)

    return out.reshape(B, C, 1, 1)


def reference_channel_attention(x, w1, w2):
    """Pure-JAX reference mirroring the PyTorch forward (f32 math)."""
    B, C, H, W = x.shape
    Ch = w1.shape[0]
    xf = x.astype(jnp.float32)
    w1m = w1.reshape(Ch, C).astype(jnp.float32)
    w2m = w2.reshape(C, Ch).astype(jnp.float32)
    avg = jnp.mean(xf, axis=(2, 3))                     # (B, C)
    mx = jnp.max(xf, axis=(2, 3))                       # (B, C)

    def mlp(v):
        return jnp.maximum(v @ w1m.T, 0.0) @ w2m.T

    out = jax.nn.sigmoid(mlp(avg) + mlp(mx))
    return out.reshape(B, C, 1, 1).astype(x.dtype)


def _check(name, out, ref, atol, rtol):
    o = out.astype(jnp.float32)
    r = ref.astype(jnp.float32)
    err = jnp.max(jnp.abs(o - r))
    assert out.shape == ref.shape, f"{name}: shape {out.shape} vs {ref.shape}"
    assert jnp.allclose(o, r, atol=atol, rtol=rtol), (
        f"{name}: max abs err = {err}")


if __name__ == "__main__":
    key = jax.random.PRNGKey(0)

    # Test 1: f32, C < 128 (VPU sum path), multiple 128-aligned spatial tiles.
    kx, k1, k2, key = jax.random.split(key, 4)
    B, C, H, W, Ch = 2, 32, 16, 16, 4
    x = jax.random.normal(kx, (B, C, H, W), dtype=jnp.float32)
    w1 = jax.random.normal(k1, (Ch, C, 1, 1), dtype=jnp.float32) * 0.1
    w2 = jax.random.normal(k2, (C, Ch, 1, 1), dtype=jnp.float32) * 0.1
    out = jax.block_until_ready(
        channel_attention(x, w1, w2, target_block_bytes=C * 128 * 4))
    _check("f32/vpu/multi-tile", out, reference_channel_attention(x, w1, w2),
           5e-3, 5e-3)

    # Test 2: bf16, tiny odd spatial (7x7 = 49), single full-extent tile.
    kx, k1, k2, key = jax.random.split(key, 4)
    B, C, H, W, Ch = 3, 16, 7, 7, 2
    x = jax.random.normal(kx, (B, C, H, W), dtype=jnp.bfloat16)
    w1 = jax.random.normal(k1, (Ch, C, 1, 1), dtype=jnp.float32) * 0.1
    w2 = jax.random.normal(k2, (C, Ch, 1, 1), dtype=jnp.float32) * 0.1
    out = jax.block_until_ready(channel_attention(x, w1, w2))
    _check("bf16/odd-spatial", out, reference_channel_attention(x, w1, w2),
           2e-2, 2e-2)

    # Test 3: f32, C >= 128 (MXU sum path), ragged last spatial tile (no pad).
    kx, k1, k2, key = jax.random.split(key, 4)
    B, C, H, W, Ch = 2, 256, 25, 40, 16
    x = jax.random.normal(kx, (B, C, H, W), dtype=jnp.float32)
    w1 = jax.random.normal(k1, (Ch, C, 1, 1), dtype=jnp.float32) * 0.1
    w2 = jax.random.normal(k2, (C, Ch, 1, 1), dtype=jnp.float32) * 0.1
    out = jax.block_until_ready(
        channel_attention(x, w1, w2, target_block_bytes=(C + 128) * 128 * 4))
    _check("f32/mxu/ragged", out, reference_channel_attention(x, w1, w2),
           5e-3, 5e-3)

    # Test 4: bf16, MXU sum path, ragged last tile, B = 1.
    kx, k1, k2, key = jax.random.split(key, 4)
    B, C, H, W, Ch = 1, 128, 15, 20, 16
    x = jax.random.normal(kx, (B, C, H, W), dtype=jnp.bfloat16)
    w1 = jax.random.normal(k1, (Ch, C, 1, 1), dtype=jnp.float32) * 0.1
    w2 = jax.random.normal(k2, (C, Ch, 1, 1), dtype=jnp.float32) * 0.1
    out = jax.block_until_ready(
        channel_attention(x, w1, w2, target_block_bytes=(C + 128) * 128 * 2))
    _check("bf16/mxu/ragged/B1", out, reference_channel_attention(x, w1, w2),
           2e-2, 2e-2)

    print("KERNEL_OK")
</pallas_src>

<mosaic_0001>
module attributes {stable_mosaic.version = 11 : i64} {
  func.func @_channel_attention_kernel(%arg0: i32, %arg1: i32, %arg2: memref<1x32x128xf32, #tpu.memory_space<vmem>>, %arg3: memref<4x32xf32, #tpu.memory_space<vmem>>, %arg4: memref<32x4xf32, #tpu.memory_space<vmem>>, %arg5: memref<1x32x1xf32, #tpu.memory_space<vmem>>, %arg6: memref<32x1xf32, #tpu.memory_space<vmem>>, %arg7: memref<32x1xf32, #tpu.memory_space<vmem>>) attributes {dimension_semantics = [#tpu.dimension_semantics<parallel>, #tpu.dimension_semantics<arbitrary>], iteration_bounds = array<i64: 2, 2>, scalar_prefetch = 0 : i64, scratch_operands = 2 : i64, tpu.core_type = #tpu.core_type<tc>, window_params = [{transform_indices = @transform_0, window_bounds = array<i64: 1, 32, 128>}, {pipeline_mode = #tpu.pipeline_mode<synchronous>, transform_indices = @transform_1, window_bounds = array<i64: 4, 32>}, {pipeline_mode = #tpu.pipeline_mode<synchronous>, transform_indices = @transform_2, window_bounds = array<i64: 32, 4>}, {transform_indices = @transform_3, window_bounds = array<i64: 1, 32, 1>}]} {
    %c0_i32 = arith.constant 0 : i32
    %0 = arith.cmpi eq, %arg1, %c0_i32 : i32
    %1 = arith.extui %0 : i1 to i32
    %c0_i32_0 = arith.constant 0 : i32
    %2 = arith.cmpi ne, %1, %c0_i32_0 : i32
    scf.if %2 {
      %cst_13 = arith.constant 0.000000e+00 : f32
      %18 = vector.broadcast %cst_13 : f32 to vector<32x1xf32>
      %c0_14 = arith.constant 0 : index
      %c0_15 = arith.constant 0 : index
      %19 = vector.load %arg6[%c0_14, %c0_15] : memref<32x1xf32, #tpu.memory_space<vmem>>, vector<32x1xf32>
      tpu.vector_store %arg6[%c0_14, %c0_15], %18 {strides = array<i32>} : memref<32x1xf32, #tpu.memory_space<vmem>>, vector<32x1xf32>,
      %cst_16 = arith.constant 0xFF800000 : f32
      %20 = vector.broadcast %cst_16 : f32 to vector<32x1xf32>
      %c0_17 = arith.constant 0 : index
      %c0_18 = arith.constant 0 : index
      %21 = vector.load %arg7[%c0_17, %c0_18] : memref<32x1xf32, #tpu.memory_space<vmem>>, vector<32x1xf32>
      tpu.vector_store %arg7[%c0_17, %c0_18], %20 {strides = array<i32>} : memref<32x1xf32, #tpu.memory_space<vmem>>, vector<32x1xf32>,
    } else {
    }
    %c0 = arith.constant 0 : index
    %c0_1 = arith.constant 0 : index
    %c0_2 = arith.constant 0 : index
    %3 = vector.load %arg2[%c0, %c0_1, %c0_2] : memref<1x32x128xf32, #tpu.memory_space<vmem>>, vector<1x32x128xf32>
    %4 = vector.shape_cast %3 : vector<1x32x128xf32> to vector<32x128xf32>
    %c0_3 = arith.constant 0 : index
    %c0_4 = arith.constant 0 : index
    %5 = vector.load %arg6[%c0_3, %c0_4] : memref<32x1xf32, #tpu.memory_space<vmem>>, vector<32x1xf32>
    %cst = arith.constant dense<0.000000e+00> : vector<32xf32>
    %6 = vector.multi_reduction <add>, %4, %cst [1] : vector<32x128xf32> to vector<32xf32>
    %7 = vector.shape_cast %6 : vector<32xf32> to vector<32x1xf32>
    %8 = arith.addf %5, %7 : vector<32x1xf32>
    %c0_5 = arith.constant 0 : index
    %c0_6 = arith.constant 0 : index
    %9 = vector.load %arg6[%c0_5, %c0_6] : memref<32x1xf32, #tpu.memory_space<vmem>>, vector<32x1xf32>
    tpu.vector_store %arg6[%c0_5, %c0_6], %8 {strides = array<i32>} : memref<32x1xf32, #tpu.memory_space<vmem>>, vector<32x1xf32>,
    %c0_7 = arith.constant 0 : index
    %c0_8 = arith.constant 0 : index
    %10 = vector.load %arg7[%c0_7, %c0_8] : memref<32x1xf32, #tpu.memory_space<vmem>>, vector<32x1xf32>
    %cst_9 = arith.constant dense<0xFF800000> : vector<32xf32>
    %11 = vector.multi_reduction <maximumf>, %4, %cst_9 [1] : vector<32x128xf32> to vector<32xf32>
    %12 = vector.shape_cast %11 : vector<32xf32> to vector<32x1xf32>
    %13 = arith.maximumf %10, %12 : vector<32x1xf32>
    %c0_10 = arith.constant 0 : index
    %c0_11 = arith.constant 0 : index
    %14 = vector.load %arg7[%c0_10, %c0_11] : memref<32x1xf32, #tpu.memory_space<vmem>>, vector<32x1xf32>
    tpu.vector_store %arg7[%c0_10, %c0_11], %13 {strides = array<i32>} : memref<32x1xf32, #tpu.memory_space<vmem>>, vector<32x1xf32>,
    %c1_i32 = arith.constant 1 : i32
    %15 = arith.cmpi eq, %arg1, %c1_i32 : i32
    %16 = arith.extui %15 : i1 to i32
    %c0_i32_12 = arith.constant 0 : i32
    %17 = arith.cmpi ne, %16, %c0_i32_12 : i32
    scf.if %17 {
      %c0_13 = arith.constant 0 : index
      %c0_14 = arith.constant 0 : index
      %18 = vector.load %arg6[%c0_13, %c0_14] : memref<32x1xf32, #tpu.memory_space<vmem>>, vector<32x1xf32>
      %cst_15 = arith.constant 3.906250e-03 : f32
      %19 = vector.broadcast %cst_15 : f32 to vector<32x1xf32>
      %20 = arith.mulf %18, %19 : vector<32x1xf32>
      %c0_16 = arith.constant 0 : index
      %c0_17 = arith.constant 0 : index
      %21 = vector.load %arg7[%c0_16, %c0_17] : memref<32x1xf32, #tpu.memory_space<vmem>>, vector<32x1xf32>
      %22 = tpu.concatenate %20, %21 in 1 : vector<32x1xf32>, vector<32x1xf32> -> vector<32x2xf32>
      %c0_18 = arith.constant 0 : index
      %c0_19 = arith.constant 0 : index
      %23 = vector.load %arg3[%c0_18, %c0_19] : memref<4x32xf32, #tpu.memory_space<vmem>>, vector<4x32xf32>
      %c0_20 = arith.constant 0 : index
      %c0_21 = arith.constant 0 : index
      %24 = vector.load %arg4[%c0_20, %c0_21] : memref<32x4xf32, #tpu.memory_space<vmem>>, vector<32x4xf32>
      %cst_22 = arith.constant dense<0.000000e+00> : vector<4x2xf32>
      %25 = tpu.matmul %23, %22, %cst_22 {dimension_numbers = #tpu.dot_dimension_numbers<[1], [0], [0], [1], [0, 0, 1, 1], [], []>} : vector<4x32xf32>, vector<32x2xf32>, vector<4x2xf32> -> vector<4x2xf32>
      %cst_23 = arith.constant 0.000000e+00 : f32
      %26 = vector.broadcast %cst_23 : f32 to vector<4x2xf32>
      %27 = arith.maximumf %25, %26 : vector<4x2xf32>
      %cst_24 = arith.constant dense<0.000000e+00> : vector<32x2xf32>
      %28 = tpu.matmul %24, %27, %cst_24 {dimension_numbers = #tpu.dot_dimension_numbers<[1], [0], [0], [1], [0, 0, 1, 1], [], []>} : vector<32x4xf32>, vector<4x2xf32>, vector<32x2xf32> -> vector<32x2xf32>
      %29 = vector.extract_strided_slice %28 {offsets = [0, 0], sizes = [32, 1], strides = [1, 1]} : vector<32x2xf32> to vector<32x1xf32>
      %30 = vector.extract_strided_slice %28 {offsets = [0, 1], sizes = [32, 1], strides = [1, 1]} : vector<32x2xf32> to vector<32x1xf32>
      %31 = arith.addf %29, %30 : vector<32x1xf32>
      %32 = arith.negf %31 : vector<32x1xf32>
      %33 = math.exp %32 : vector<32x1xf32>
      %cst_25 = arith.constant 1.000000e+00 : f32
      %34 = vector.broadcast %cst_25 : f32 to vector<32x1xf32>
      %35 = arith.addf %34, %33 : vector<32x1xf32>
      %36 = arith.divf %34, %35 : vector<32x1xf32>
      %c0_26 = arith.constant 0 : index
      %c0_27 = arith.constant 0 : index
      %c0_28 = arith.constant 0 : index
      %37 = vector.load %arg5[%c0_26, %c0_27, %c0_28] : memref<1x32x1xf32, #tpu.memory_space<vmem>>, vector<1x32x1xf32>
      %38 = vector.shape_cast %37 : vector<1x32x1xf32> to vector<32x1xf32>
      %39 = vector.shape_cast %36 : vector<32x1xf32> to vector<1x32x1xf32>
      tpu.vector_store %arg5[%c0_26, %c0_27, %c0_28], %39 {strides = array<i32>} : memref<1x32x1xf32, #tpu.memory_space<vmem>>, vector<1x32x1xf32>,
    } else {
    }
    return
  }
  func.func @transform_0(%arg0: i32, %arg1: i32) -> (i32, i32, i32) {
    %c0_i32 = arith.constant 0 : i32
    %c0_i32_0 = arith.constant 0 : i32
    return %arg0, %c0_i32, %arg1 : i32, i32, i32
  }
  func.func @transform_1(%arg0: i32, %arg1: i32) -> (i32, i32) {
    %c0_i32 = arith.constant 0 : i32
    %c0_i32_0 = arith.constant 0 : i32
    %c0_i32_1 = arith.constant 0 : i32
    return %c0_i32, %c0_i32_0 : i32, i32
  }
  func.func @transform_2(%arg0: i32, %arg1: i32) -> (i32, i32) {
    %c0_i32 = arith.constant 0 : i32
    %c0_i32_0 = arith.constant 0 : i32
    %c0_i32_1 = arith.constant 0 : i32
    return %c0_i32, %c0_i32_0 : i32, i32
  }
  func.func @transform_3(%arg0: i32, %arg1: i32) -> (i32, i32, i32) {
    %c0_i32 = arith.constant 0 : i32
    %c0_i32_0 = arith.constant 0 : i32
    %c0_i32_1 = arith.constant 0 : i32
    return %arg0, %c0_i32, %c0_i32_0 : i32, i32, i32
  }
}

</mosaic_0001>

<llo_original>
// kernel: tpu_custom_call.1
$region0: #{tpu_custom_call.1}
  #allocation0 [shape = 'u32[]', space=smem, size = 0x4, offset = 0x4, fixed_abs, tag = 'smem constant byte address 0x4 - core index']
  #allocation1 [shape = 'u32[144,128]{1,0:T(1,128)}', space=vmem, size = 0x12000, scoped, tag = 'internal scratch']
  #allocation2 [shape = 'f32[32,1]{1,0:T(8,128)}', space=vmem, size = 0x4000, scoped, tag = 'scratch operand']
  #allocation3 [shape = 'f32[32,1]{1,0:T(8,128)}', space=vmem, size = 0x4000, scoped, tag = 'scratch operand']
  %s0 = inlined_call_operand.hbm [shape: f32[2,32,256], index: 0, kind: input, shape index: {}]
  %s1 = inlined_call_operand.vmem [shape: f32[4,32], index: 1, kind: input, shape index: {}]
  %s2 = inlined_call_operand.vmem [shape: f32[32,4], index: 2, kind: input, shape index: {}]
  %s3 = inlined_call_operand.vmem [shape: f32[2,32,1], index: 3, kind: output, shape index: {}]
  %s4 = sld [smem:[#allocation0]]
  $region57: #{tpu_custom_call.1} parent=0
    _
  %s6 = ssub.s32 1, %s4
  %s7 = scalar_select 0, %s6, %s4
  $region1: #{tpu_custom_call.1} parent=0
    #allocation4 [shape = 'u8[32768]{0}', space=vmem, size = 0x8000, scoped, tag = 'input window, operand 0']
    #allocation5 [shape = 's32[2]{0}', space=sflag, size = 0x8, scoped, tag = 'scoped memory for tpu_custom_call.1']
    %8 = vsyncpa [#allocation5], 0
    %s9 = scalar_lea.sflag [#allocation5], 1
    %10 = vsyncpa %s9, 0
    loop: start=0, step=1, limit=6
    $region2: #{tpu_custom_call.1} parent=1 // loop_pre_header
      _
    $region3: #{tpu_custom_call.1} parent=1 // loop_header
      %s12 = sphi 0, %s16
      %p13 = scmp.ge.s32.totalorder %s12, 6
      %s19 = sphi 0, %s31
      %s20 = sphi 0, %s27
      %s21 = sphi 0, %s19
      %s22 = sphi 0, %s20
      %s23 = sphi 0, %s21
      %s24 = sphi 0, %s22
      %s36 = sphi 0, %s38
      %s39 = sphi 0, %s36
      %s40 = sphi 0, %s39
      %s56 = sphi 0, %s40
      %s60 = sphi 0, %s60
      %s62 = sphi 0, %s60
      %s63 = sphi 0, %s62
      %s77 = sphi 0, %s63
      %s81 = sphi 0, %s81
      %s83 = sphi 0, %s81
      %s84 = sphi 0, %s83
      %s98 = sphi 0, %s84
      %s104 = sphi 0, %s106
      %s107 = sphi 0, %s104
      %s108 = sphi 0, %s107
      %s124 = sphi 0, %s108
    $region4: #{tpu_custom_call.1} parent=1 // loop_header_branch
      %15 = sbr.rel (%p13) target = $region8
    $region5: #{tpu_custom_call.1} parent=1 // loop_body
      %s17 = ssub.s32 %s12, 1
      %s18 = ssub.s32 %s12, 2
      %s25 = sadd.s32 1, %s20
      %p26 = scmp.ge.s32.totalorder %s25, 2
      %s27 = scalar_select %p26, 0, %s25
      %s28 = sadd.s32 1, %s19
      %s29 = scalar_select %p26, %s28, %s19
      %p30 = scmp.ge.s32.totalorder %s29, 2
      %s31 = scalar_select %p30, 0, %s29
      %s32 = ssub.s32 %s19, %s31
      %s33 = ssub.s32 %s20, %s27
      %s34 = sor.u32 %s32, %s33
      %p35 = scmp.eq.s32.totalorder %s34, 0
      %s37 = sadd.s32 %s36, 1
      %s38 = scalar_select %p35, %s36, %s37
      %p41 = pneg %p35
      %p42 = scmp.eq.s32.totalorder %s12, 3
      %p43 = por %p41, %p42
      %p44 = scmp.ne.s32.totalorder %s36, %s39
      %p45 = scmp.eq.s32.totalorder %s12, 0
      %p46 = por %p44, %p45
      %p47 = scmp.ne.s32.totalorder %s36, %s39
      %p48 = scmp.eq.s32.totalorder %s17, 3
      %p49 = por %p47, %p48
      %p50 = scmp.ne.s32.totalorder %s39, %s40
      %p51 = scmp.eq.s32.totalorder %s17, 0
      %p52 = por %p50, %p51
      %p53 = scmp.ne.s32.totalorder %s39, %s40
      %p54 = scmp.eq.s32.totalorder %s18, 3
      %p55 = por %p53, %p54
      %p57 = scmp.ne.s32.totalorder %s40, %s56
      %p58 = scmp.eq.s32.totalorder %s18, 0
      %p59 = por %p57, %p58
      %s61 = sadd.s32 %s60, 1
      %p64 = scmp.eq.s32.totalorder %s12, 3
      %p65 = scmp.ne.s32.totalorder %s60, %s62
      %p66 = scmp.eq.s32.totalorder %s12, 0
      %p67 = por %p65, %p66
      %p68 = scmp.ne.s32.totalorder %s60, %s62
      %p69 = scmp.eq.s32.totalorder %s17, 3
      %p70 = por %p68, %p69
      %p71 = scmp.ne.s32.totalorder %s62, %s63
      %p72 = scmp.eq.s32.totalorder %s17, 0
      %p73 = por %p71, %p72
      %p74 = scmp.ne.s32.totalorder %s62, %s63
      %p75 = scmp.eq.s32.totalorder %s18, 3
      %p76 = por %p74, %p75
      %p78 = scmp.ne.s32.totalorder %s63, %s77
      %p79 = scmp.eq.s32.totalorder %s18, 0
      %p80 = por %p78, %p79
      %s82 = sadd.s32 %s81, 1
      %p85 = scmp.eq.s32.totalorder %s12, 3
      %p86 = scmp.ne.s32.totalorder %s81, %s83
      %p87 = scmp.eq.s32.totalorder %s12, 0
      %p88 = por %p86, %p87
      %p89 = scmp.ne.s32.totalorder %s81, %s83
      %p90 = scmp.eq.s32.totalorder %s17, 3
      %p91 = por %p89, %p90
      %p92 = scmp.ne.s32.totalorder %s83, %s84
      %p93 = scmp.eq.s32.totalorder %s17, 0
      %p94 = por %p92, %p93
      %p95 = scmp.ne.s32.totalorder %s83, %s84
      %p96 = scmp.eq.s32.totalorder %s18, 3
      %p97 = por %p95, %p96
      %p99 = scmp.ne.s32.totalorder %s84, %s98
      %p100 = scmp.eq.s32.totalorder %s18, 0
      %p101 = por %p99, %p100
      %s102 = ssub.s32 %s19, %s31
      %p103 = scmp.eq.s32.totalorder %s102, 0
      %s105 = sadd.s32 %s104, 1
      %s106 = scalar_select %p103, %s104, %s105
      %p109 = pneg %p103
      %p110 = scmp.eq.s32.totalorder %s12, 3
      %p111 = por %p109, %p110
      %p112 = scmp.ne.s32.totalorder %s104, %s107
      %p113 = scmp.eq.s32.totalorder %s12, 0
      %p114 = por %p112, %p113
      %p115 = scmp.ne.s32.totalorder %s104, %s107
      %p116 = scmp.eq.s32.totalorder %s17, 3
      %p117 = por %p115, %p116
      %p118 = scmp.ne.s32.totalorder %s107, %s108
      %p119 = scmp.eq.s32.totalorder %s17, 0
      %p120 = por %p118, %p119
      %p121 = scmp.ne.s32.totalorder %s107, %s108
      %p122 = scmp.eq.s32.totalorder %s18, 3
      %p123 = por %p121, %p122
      %p125 = scmp.ne.s32.totalorder %s108, %s124
      %p126 = scmp.eq.s32.totalorder %s18, 0
      %p127 = por %p125, %p126
      %p128 = scmp.le.s32.totalorder 1, %s12
      %p129 = scmp.lt.s32.totalorder %s12, 5
      %p130 = pnand %p128, %p129
      %p131 = pneg %p130
      // Predicated region
      $region9: #{tpu_custom_call.1} parent=5 // pred_check
        _
      $region10: #{tpu_custom_call.1} parent=5 // pred_check_branch
        %133 = sbr.rel (%p130) target = $region12
      $region11: #{tpu_custom_call.1} parent=5 // pred_region
        %s134 = ssub.s32 %s12, 1
        // Predicated region
        $region13: #{tpu_custom_call.1} parent=11 // pred_check
          %p135 = pneg %p73
        $region14: #{tpu_custom_call.1} parent=11 // pred_check_branch
          %137 = sbr.rel (%p135) target = $region16
        $region15: #{tpu_custom_call.1} parent=11 // pred_region
          _
        $region16: #{tpu_custom_call.1} parent=11 // pred_fallthru
          _
        // Predicated region
        $region17: #{tpu_custom_call.1} parent=11 // pred_check
          %p138 = pneg %p94
        $region18: #{tpu_custom_call.1} parent=11 // pred_check_branch
          %140 = sbr.rel (%p138) target = $region20
        $region19: #{tpu_custom_call.1} parent=11 // pred_region
          _
        $region20: #{tpu_custom_call.1} parent=11 // pred_fallthru
          _
      $region12: #{tpu_custom_call.1} parent=5 // pred_fallthru
        _
      %p141 = scmp.lt.s32.totalorder %s12, 4
      // Predicated region
      $region21: #{tpu_custom_call.1} parent=5 // pred_check
        %p142 = pneg %p141
      $region22: #{tpu_custom_call.1} parent=5 // pred_check_branch
        %144 = sbr.rel (%p142) target = $region24
      $region23: #{tpu_custom_call.1} parent=5 // pred_region
        // Predicated region
        $region25: #{tpu_custom_call.1} parent=23 // pred_check
          %p145 = pneg %p46
        $region26: #{tpu_custom_call.1} parent=23 // pred_check_branch
          %147 = sbr.rel (%p145) target = $region28
        $region27: #{tpu_custom_call.1} parent=23 // pred_region
          %s148 = sand.u32 %s36, 1
          %s149 = scalar_lea.sflag [#allocation5], %s148
          %s150 = sand.u32 %s36, 1
          %s151 = smul.addr %s150, 32
          %s152 = scalar_lea.vmem [#allocation4], %s151
          %s154 = ssub.s32 512, 512
          %155 = vsyncadd %s149, %s154
          %s156 = smul.addr %s19, 8
          %s157 = sadd.s32 %s20, %s156
          %s158 = smul.addr %s157, 128
          %s159 = scalar_lea.hbm %s0, %s158
          %s160 = sshll.u32 %s152, 4
          %s161 = int_to_ptr.vmem [resolvable:$true] %s160
          %166 = dma.hbm_to_vmem [thread:$0]  %s159, 512, %s161, %s149, 256, 128, 8
        $region28: #{tpu_custom_call.1} parent=23 // pred_fallthru
          _
      $region24: #{tpu_custom_call.1} parent=5 // pred_fallthru
        _
      %p167 = scmp.le.s32.totalorder 1, %s12
      %p168 = scmp.lt.s32.totalorder %s12, 5
      %p169 = pnand %p167, %p168
      %p170 = pneg %p169
      // Predicated region
      $region29: #{tpu_custom_call.1} parent=5 // pred_check
        _
      $region30: #{tpu_custom_call.1} parent=5 // pred_check_branch
        %172 = sbr.rel (%p169) target = $region32
      $region31: #{tpu_custom_call.1} parent=5 // pred_region
        %s173 = ssub.s32 %s12, 1
        %s174 = sand.u32 %s39, 1
        %s175 = scalar_lea.sflag [#allocation5], %s174
        %s176 = sand.u32 %s39, 1
        %s177 = smul.addr %s176, 32
        %s178 = scalar_lea.vmem [#allocation4], %s177
        // Predicated region
        $region33: #{tpu_custom_call.1} parent=31 // pred_check
          %p179 = pneg %p52
        $region34: #{tpu_custom_call.1} parent=31 // pred_check_branch
          %181 = sbr.rel (%p179) target = $region36
        $region35: #{tpu_custom_call.1} parent=31 // pred_region
          %182 = dma.done %s175, 512
        $region36: #{tpu_custom_call.1} parent=31 // pred_fallthru
          _
        %s183 = sand.u32 %s39, 1
        %s184 = scalar_lea.sflag [#allocation5], %s183
        %s185 = sand.u32 %s39, 1
        %s186 = smul.addr %s185, 32
        %s187 = scalar_lea.vmem [#allocation4], %s186
        %p188 = pneg %p52
        %p189 = pneg %p49
        %p190 = pneg %p73
        %p191 = pneg %p70
        %p192 = pneg %p94
        %p193 = pneg %p91
        %p194 = pneg %p120
        %p195 = pneg %p117
        %p196 = scmp.lt.s32.totalorder %s21, 1
        %s197 = scalar_select %p196, %s21, 1
        %s198 = smul.addr %s197, 4
        %s199 = smul.addr %s198, 8
        %s200 = scalar_lea.vmem %s3, %s199
        %p201 = scmp.lt.s32.totalorder %s21, 1
        %s202 = scalar_select %p201, %s21, 1
        %s203 = smul.addr %s202, 4
        %s204 = smul.addr %s203, 8
        %s205 = scalar_lea.vmem %s3, %s204
        %p206 = scmp.eq.s32.totalorder %s22, 0
        // Predicated region
        $region37: #{tpu_custom_call.1} parent=31 // pred_check
          %p207 = pneg %p206
        $region38: #{tpu_custom_call.1} parent=31 // pred_check_branch
          %209 = sbr.rel (%p207) target = $region40
        $region39: #{tpu_custom_call.1} parent=31 // pred_region
          %vm210 = vcmask 7168
          %211 = vst.msk [vmem:[#allocation2] sm:$0xff] %vm210, 0.0
          %212 = vst.msk [vmem:[#allocation2 + $0x8] sm:$0xff] %vm210, 0.0
          %213 = vst.msk [vmem:[#allocation2 + $0x10] sm:$0xff] %vm210, 0.0
          %214 = vst.msk [vmem:[#allocation2 + $0x18] sm:$0xff] %vm210, 0.0
          %215 = vst.msk [vmem:[#allocation3] sm:$0xff] %vm210, -inf
          %216 = vst.msk [vmem:[#allocation3 + $0x8] sm:$0xff] %vm210, -inf
          %217 = vst.msk [vmem:[#allocation3 + $0x10] sm:$0xff] %vm210, -inf
          %218 = vst.msk [vmem:[#allocation3 + $0x18] sm:$0xff] %vm210, -inf
        $region40: #{tpu_custom_call.1} parent=31 // pred_fallthru
          _
        %v219 = vld [vmem:[%s178] sm:$0xff]
        %v220 = vld [vmem:[%s178 + $0x8] sm:$0xff]
        %v221 = vld [vmem:[%s178 + $0x10] sm:$0xff]
        %v222 = vld [vmem:[%s178 + $0x18] sm:$0xff]
        %v223 = vld [vmem:[#allocation2] sm:$0xff]
        %v224 = vld [vmem:[#allocation2 + $0x8] sm:$0xff]
        %v225 = vld [vmem:[#allocation2 + $0x10] sm:$0xff]
        %v226 = vld [vmem:[#allocation2 + $0x18] sm:$0xff]
        %227 = vadd.xlane.f32.xlu0 %v219
        %v228 = vpop.xlane.xlu0 %227
        %229 = vadd.xlane.f32.xlu0 %v220
        %v230 = vpop.xlane.xlu0 %229
        %231 = vadd.xlane.f32.xlu0 %v221
        %v232 = vpop.xlane.xlu0 %231
        %233 = vadd.xlane.f32.xlu0 %v222
        %v234 = vpop.xlane.xlu0 %233
        %v235 = vadd.f32 %v223, %v228
        %v236 = vadd.f32 %v224, %v230
        %v237 = vadd.f32 %v225, %v232
        %v238 = vadd.f32 %v226, %v234
        %vm239 = vcmask 7168
        %240 = vst.msk [vmem:[#allocation2] sm:$0xff] %vm239, %v235
        %241 = vst.msk [vmem:[#allocation2 + $0x8] sm:$0xff] %vm239, %v236
        %242 = vst.msk [vmem:[#allocation2 + $0x10] sm:$0xff] %vm239, %v237
        %243 = vst.msk [vmem:[#allocation2 + $0x18] sm:$0xff] %vm239, %v238
        %v244 = vld [vmem:[#allocation3] sm:$0xff]
        %v245 = vld [vmem:[#allocation3 + $0x8] sm:$0xff]
        %v246 = vld [vmem:[#allocation3 + $0x10] sm:$0xff]
        %v247 = vld [vmem:[#allocation3 + $0x18] sm:$0xff]
        %248 = vmax.xlane.f32.xlu0 %v219
        %v249 = vpop.xlane.xlu0 %248
        %250 = vmax.xlane.f32.xlu0 %v220
        %v251 = vpop.xlane.xlu0 %250
        %252 = vmax.xlane.f32.xlu0 %v221
        %v253 = vpop.xlane.xlu0 %252
        %254 = vmax.xlane.f32.xlu0 %v222
        %v255 = vpop.xlane.xlu0 %254
        %v256 = vmax.f32 %v244, %v249
        %v257 = vmax.f32 %v245, %v251
        %v258 = vmax.f32 %v246, %v253
        %v259 = vmax.f32 %v247, %v255
        %260 = vst.msk [vmem:[#allocation3] sm:$0xff] %vm239, %v256
        %261 = vst.msk [vmem:[#allocation3 + $0x8] sm:$0xff] %vm239, %v257
        %262 = vst.msk [vmem:[#allocation3 + $0x10] sm:$0xff] %vm239, %v258
        %263 = vst.msk [vmem:[#allocation3 + $0x18] sm:$0xff] %vm239, %v259
        %p264 = scmp.eq.s32.totalorder %s22, 1
        // Predicated region
        $region41: #{tpu_custom_call.1} parent=31 // pred_check
          %p265 = pneg %p264
        $region42: #{tpu_custom_call.1} parent=31 // pred_check_branch
          %267 = sbr.rel (%p265) target = $region44
        $region43: #{tpu_custom_call.1} parent=31 // pred_region
          %v268 = vld [vmem:[#allocation2] sm:$0xff]
          %v269 = vld [vmem:[#allocation2 + $0x8] sm:$0xff]
          %v270 = vld [vmem:[#allocation2 + $0x10] sm:$0xff]
          %v271 = vld [vmem:[#allocation2 + $0x18] sm:$0xff]
          %v272 = vmul.f32 %v268, 0.00390625
          %v273 = vmul.f32 %v269, 0.00390625
          %v274 = vmul.f32 %v270, 0.00390625
          %v275 = vmul.f32 %v271, 0.00390625
          %v276 = vld [vmem:[#allocation3] sm:$0xff]
          %v277 = vld [vmem:[#allocation3 + $0x8] sm:$0xff]
          %v278 = vld [vmem:[#allocation3 + $0x10] sm:$0xff]
          %v279 = vld [vmem:[#allocation3 + $0x18] sm:$0xff]
          %284 = vrot.lane.b32.xlu0 %v276, 1
          %v285 = vpop.permute.xlu0 %284
          %286 = vrot.lane.b32.xlu0 %v277, 1
          %v287 = vpop.permute.xlu0 %286
          %288 = vrot.lane.b32.xlu0 %v278, 1
          %v289 = vpop.permute.xlu0 %288
          %290 = vrot.lane.b32.xlu0 %v279, 1
          %v291 = vpop.permute.xlu0 %290
          %v296 = vsel %vm239, %v272, %v285
          %v297 = vsel %vm239, %v273, %v287
          %v298 = vsel %vm239, %v274, %v289
          %v299 = vsel %vm239, %v275, %v291
          %v300 = vld [vmem:[%s1] sm:$0xf]
          %v301 = vld [vmem:[%s2] sm:$0xff]
          %v302 = vld [vmem:[%s2 + $0x8] sm:$0xff]
          %v303 = vld [vmem:[%s2 + $0x10] sm:$0xff]
          %v304 = vld [vmem:[%s2 + $0x18] sm:$0xff]
          %vm305 = vcmask 261120
          %v307 = vsel %vm305, %v300, 0
          %309 = vmatprep.subr.mxu0 0.0
          %310 = vmatpush1.msra.mxu0 %v296
          %311 = vmatprep.subr.mxu0 0.0
          %312 = vmatpush1.msra.mxu0 %v297
          %313 = vmatprep.subr.mxu0 0.0
          %314 = vmatpush1.msra.mxu0 %v298
          %315 = vmatprep.subr.mxu0 0.0
          %316 = vmatpush1.msra.mxu0 %v299
          %317 = vmatprep.subr.mxu0 0.0
          %318 = vmatpush1.msra.mxu0 0.0
          %319 = vmatprep.subr.mxu0 0.0
          %320 = vmatpush1.msra.mxu0 0.0
          %321 = vmatprep.subr.mxu0 0.0
          %322 = vmatpush1.msra.mxu0 0.0
          %323 = vmatprep.subr.mxu0 0.0
          %324 = vmatpush1.msra.mxu0 0.0
          %325 = vmatprep.subr.mxu0 0.0
          %326 = vmatpush1.msra.mxu0 0.0
          %327 = vmatprep.subr.mxu0 0.0
          %328 = vmatpush1.msra.mxu0 0.0
          %329 = vmatprep.subr.mxu0 0.0
          %330 = vmatpush1.msra.mxu0 0.0
          %331 = vmatprep.subr.mxu0 0.0
          %332 = vmatpush1.msra.mxu0 0.0
          %333 = vmatprep.subr.mxu0 0.0
          %334 = vmatpush1.msra.mxu0 0.0
          %335 = vmatprep.subr.mxu0 0.0
          %336 = vmatpush1.msra.mxu0 0.0
          %337 = vmatprep.subr.mxu0 0.0
          %338 = vmatpush1.msra.mxu0 0.0
          %339 = vmatprep.subr.mxu0 0.0
          %340 = vmatpush1.msra.mxu0 0.0
          %341 = vmatprep.subr.mxu0 0.0
          %342 = vmatpush1.msra.mxu0 0.0
          %343 = vmatprep.subr.mxu0 0.0
          %344 = vmatpush1.msra.mxu0 0.0
          %345 = vmatprep.subr.mxu0 0.0
          %346 = vmatpush1.msra.mxu0 0.0
          %347 = vmatprep.subr.mxu0 0.0
          %348 = vmatpush1.msra.mxu0 0.0
          %349 = vmatprep.subr.mxu0 0.0
          %350 = vmatpush1.msra.mxu0 0.0
          %351 = vmatprep.subr.mxu0 0.0
          %352 = vmatpush1.msra.mxu0 0.0
          %353 = vmatprep.subr.mxu0 0.0
          %354 = vmatpush1.msra.mxu0 0.0
          %355 = vmatprep.subr.mxu0 0.0
          %356 = vmatpush1.msra.mxu0 0.0
          %357 = vmatprep.subr.mxu0 0.0
          %358 = vmatpush1.msra.mxu0 0.0
          %359 = vmatprep.subr.mxu0 0.0
          %360 = vmatpush1.msra.mxu0 0.0
          %361 = vmatprep.subr.mxu0 0.0
          %362 = vmatpush1.msra.mxu0 0.0
          %363 = vmatprep.subr.mxu0 0.0
          %364 = vmatpush1.msra.mxu0 0.0
          %365 = vmatprep.subr.mxu0 0.0
          %366 = vmatpush1.msra.mxu0 0.0
          %367 = vmatprep.subr.mxu0 0.0
          %368 = vmatpush1.msra.mxu0 0.0
          %369 = vmatprep.subr.mxu0 0.0
          %370 = vmatpush1.msra.mxu0 0.0
          %371 = vmatprep.subr.mxu0 0.0
          %372 = vmatpush1.msra.mxu0 0.0
          %373 = vmatprep.mubr.f32.mxu0 0.0
          %374 = vmatmul.mubr.f32.gmra.mrb[0].mxu0 %v307
          %v375 = vpop.f32.mrb[0].mxu0
          %v376 = vadd.f32 0.0, %v375
          %v377 = vpop.f32.mrb[0].mxu0
          %378 = vdwg.mxu0
          %v379 = vmax.f32 %v376, 0.0
          %vm380 = vcmask 31744
          %v382 = vsel %vm380, %v301, 0
          %v385 = vsel %vm380, %v302, 0
          %v388 = vsel %vm380, %v303, 0
          %v391 = vsel %vm380, %v304, 0
          %vm393 = vcmask 1043456
          %v395 = vsel %vm393, %v379, 0
          %397 = vmatprep.subr.mxu0 0.0
          %398 = vmatpush1.msra.mxu0 %v395
          %399 = vmatprep.subr.mxu0 0.0
          %400 = vmatpush1.msra.mxu0 0.0
          %401 = vmatprep.subr.mxu0 0.0
          %402 = vmatpush1.msra.mxu0 0.0
          %403 = vmatprep.subr.mxu0 0.0
          %404 = vmatpush1.msra.mxu0 0.0
          %405 = vmatprep.subr.mxu0 0.0
          %406 = vmatpush1.msra.mxu0 0.0
          %407 = vmatprep.subr.mxu0 0.0
          %408 = vmatpush1.msra.mxu0 0.0
          %409 = vmatprep.subr.mxu0 0.0
          %410 = vmatpush1.msra.mxu0 0.0
          %411 = vmatprep.subr.mxu0 0.0
          %412 = vmatpush1.msra.mxu0 0.0
          %413 = vmatprep.subr.mxu0 0.0
          %414 = vmatpush1.msra.mxu0 0.0
          %415 = vmatprep.subr.mxu0 0.0
          %416 = vmatpush1.msra.mxu0 0.0
          %417 = vmatprep.subr.mxu0 0.0
          %418 = vmatpush1.msra.mxu0 0.0
          %419 = vmatprep.subr.mxu0 0.0
          %420 = vmatpush1.msra.mxu0 0.0
          %421 = vmatprep.subr.mxu0 0.0
          %422 = vmatpush1.msra.mxu0 0.0
          %423 = vmatprep.subr.mxu0 0.0
          %424 = vmatpush1.msra.mxu0 0.0
          %425 = vmatprep.subr.mxu0 0.0
          %426 = vmatpush1.msra.mxu0 0.0
          %427 = vmatprep.subr.mxu0 0.0
          %428 = vmatpush1.msra.mxu0 0.0
          %429 = vmatprep.subr.mxu0 0.0
          %430 = vmatpush1.msra.mxu0 0.0
          %431 = vmatprep.subr.mxu0 0.0
          %432 = vmatpush1.msra.mxu0 0.0
          %433 = vmatprep.subr.mxu0 0.0
          %434 = vmatpush1.msra.mxu0 0.0
          %435 = vmatprep.subr.mxu0 0.0
          %436 = vmatpush1.msra.mxu0 0.0
          %437 = vmatprep.subr.mxu0 0.0
          %438 = vmatpush1.msra.mxu0 0.0
          %439 = vmatprep.subr.mxu0 0.0
          %440 = vmatpush1.msra.mxu0 0.0
          %441 = vmatprep.subr.mxu0 0.0
          %442 = vmatpush1.msra.mxu0 0.0
          %443 = vmatprep.subr.mxu0 0.0
          %444 = vmatpush1.msra.mxu0 0.0
          %445 = vmatprep.subr.mxu0 0.0
          %446 = vmatpush1.msra.mxu0 0.0
          %447 = vmatprep.subr.mxu0 0.0
          %448 = vmatpush1.msra.mxu0 0.0
          %449 = vmatprep.subr.mxu0 0.0
          %450 = vmatpush1.msra.mxu0 0.0
          %451 = vmatprep.subr.mxu0 0.0
          %452 = vmatpush1.msra.mxu0 0.0
          %453 = vmatprep.subr.mxu0 0.0
          %454 = vmatpush1.msra.mxu0 0.0
          %455 = vmatprep.subr.mxu0 0.0
          %456 = vmatpush1.msra.mxu0 0.0
          %457 = vmatprep.subr.mxu0 0.0
          %458 = vmatpush1.msra.mxu0 0.0
          %459 = vmatprep.subr.mxu0 0.0
          %460 = vmatpush1.msra.mxu0 0.0
          %461 = vmatprep.mubr.f32.mxu0 0.0
          %462 = vmatmul.mubr.f32.gmra.mrb[0].mxu0 %v382
          %v463 = vpop.f32.mrb[0].mxu0
          %v464 = vadd.f32 0.0, %v463
          %v465 = vpop.f32.mrb[0].mxu0
          %466 = vmatprep.mubr.f32.mxu0 0.0
          %467 = vmatmul.mubr.f32.gmra.mrb[0].mxu0 %v385
          %v468 = vpop.f32.mrb[0].mxu0
          %v469 = vadd.f32 0.0, %v468
          %v470 = vpop.f32.mrb[0].mxu0
          %471 = vmatprep.mubr.f32.mxu0 0.0
          %472 = vmatmul.mubr.f32.gmra.mrb[0].mxu0 %v388
          %v473 = vpop.f32.mrb[0].mxu0
          %v474 = vadd.f32 0.0, %v473
          %v475 = vpop.f32.mrb[0].mxu0
          %476 = vmatprep.mubr.f32.mxu0 0.0
          %477 = vmatmul.mubr.f32.gmra.mrb[0].mxu0 %v391
          %v478 = vpop.f32.mrb[0].mxu0
          %v479 = vadd.f32 0.0, %v478
          %v480 = vpop.f32.mrb[0].mxu0
          %481 = vdwg.mxu0
          %486 = vrot.lane.b32.xlu0 %v464, 127
          %v487 = vpop.permute.xlu0 %486
          %488 = vrot.lane.b32.xlu0 %v469, 127
          %v489 = vpop.permute.xlu0 %488
          %490 = vrot.lane.b32.xlu0 %v474, 127
          %v491 = vpop.permute.xlu0 %490
          %492 = vrot.lane.b32.xlu0 %v479, 127
          %v493 = vpop.permute.xlu0 %492
          %v498 = vadd.f32 %v464, %v487
          %v499 = vadd.f32 %v469, %v489
          %v500 = vadd.f32 %v474, %v491
          %v501 = vadd.f32 %v479, %v493
          %v502 = vxor.u32 %v498, 2147483648
          %v503 = vxor.u32 %v499, 2147483648
          %v504 = vxor.u32 %v500, 2147483648
          %v505 = vxor.u32 %v501, 2147483648
          %v506 = vmul.f32 %v502, 1.442695
          %v507 = vpow.pop %v506
          %v508 = vmul.f32 %v503, 1.442695
          %v509 = vpow.pop %v508
          %v510 = vmul.f32 %v504, 1.442695
          %v511 = vpow.pop %v510
          %v512 = vmul.f32 %v505, 1.442695
          %v513 = vpow.pop %v512
          %v514 = vadd.f32 %v507, 1.0
          %v515 = vadd.f32 %v509, 1.0
          %v516 = vadd.f32 %v511, 1.0
          %v517 = vadd.f32 %v513, 1.0
          %v518 = vrcp.pop %v514
          %v519 = vmul.f32 1.0, %v518
          %v520 = vrcp.pop %v515
          %v521 = vmul.f32 1.0, %v520
          %v522 = vrcp.pop %v516
          %v523 = vmul.f32 1.0, %v522
          %v524 = vrcp.pop %v517
          %v525 = vmul.f32 1.0, %v524
          %526 = vst.msk [vmem:[%s205] sm:$0xff] %vm239, %v519
          %527 = vst.msk [vmem:[%s205 + $0x8] sm:$0xff] %vm239, %v521
          %528 = vst.msk [vmem:[%s205 + $0x10] sm:$0xff] %vm239, %v523
          %529 = vst.msk [vmem:[%s205 + $0x18] sm:$0xff] %vm239, %v525
        $region44: #{tpu_custom_call.1} parent=31 // pred_fallthru
          _
        %p530 = scmp.lt.s32.totalorder %s21, 1
        %s531 = scalar_select %p530, %s21, 1
        %s532 = smul.addr %s531, 4
        %s533 = smul.addr %s532, 8
        %s534 = scalar_lea.vmem %s3, %s533
        // Predicated region
        $region45: #{tpu_custom_call.1} parent=31 // pred_check
          %p535 = pneg %p117
        $region46: #{tpu_custom_call.1} parent=31 // pred_check_branch
          %537 = sbr.rel (%p535) target = $region48
        $region47: #{tpu_custom_call.1} parent=31 // pred_region
          _
        $region48: #{tpu_custom_call.1} parent=31 // pred_fallthru
          _
      $region32: #{tpu_custom_call.1} parent=5 // pred_fallthru
        _
      %p538 = scmp.le.s32.totalorder 2, %s12
      // Predicated region
      $region49: #{tpu_custom_call.1} parent=5 // pred_check
        %p539 = pneg %p538
      $region50: #{tpu_custom_call.1} parent=5 // pred_check_branch
        %541 = sbr.rel (%p539) target = $region52
      $region51: #{tpu_custom_call.1} parent=5 // pred_region
        %s542 = ssub.s32 %s12, 2
        // Predicated region
        $region53: #{tpu_custom_call.1} parent=51 // pred_check
          %p543 = pneg %p123
        $region54: #{tpu_custom_call.1} parent=51 // pred_check_branch
          %545 = sbr.rel (%p543) target = $region56
        $region55: #{tpu_custom_call.1} parent=51 // pred_region
          %p546 = scmp.lt.s32.totalorder %s23, 1
          %s547 = scalar_select %p546, %s23, 1
          %s548 = smul.addr %s547, 4
          %s549 = smul.addr %s548, 8
          %s550 = scalar_lea.vmem %s3, %s549
        $region56: #{tpu_custom_call.1} parent=51 // pred_fallthru
          _
      $region52: #{tpu_custom_call.1} parent=5 // pred_fallthru
        _
    $region6: #{tpu_custom_call.1} parent=1 // loop_footer
      %s16 = sadd.s32 1, %s12
    $region7: #{tpu_custom_call.1} parent=1 // loop_footer_branch
      %11 = sbr.rel target = $region3
    $region8: #{tpu_custom_call.1} parent=1 // loop_exit
      _
    %551 = vsyncpa [#allocation5], 1
    %s552 = scalar_lea.sflag [#allocation5], 1
    %553 = vsyncpa %s552, 1

</llo_original>
